<compile_context>
chip_gen: v6e
topology: v6e:2x2x1
jax: 0.10.0
libtpu: 0.0.40
codegen_flags: <defaults>
</compile_context>

<pallas_src>
import jax
import jax.numpy as jnp
from jax.experimental import pallas as pl
from jax.experimental.pallas import tpu as pltpu


def _embed_kernel(tok_ref, w_ref, o_ref):
    # tok_ref: (T, 1)            int32 token ids for this block (VMEM)
    # w_ref:   (d_vocab, d_model) full embedding table, resident in VMEM
    # o_ref:   (T, d_model)       output tile
    t = o_ref.shape[0]
    d_vocab = w_ref.shape[0]

    tok = tok_ref[...]                                              # (T, 1)
    vocab_ids = jax.lax.broadcasted_iota(jnp.int32, (t, d_vocab), 1)
    onehot = (tok == vocab_ids).astype(w_ref.dtype)                 # (T, d_vocab)

    # Gather on the MXU: one-hot matmul selects the embedding rows.
    o_ref[...] = jnp.dot(
        onehot, w_ref[...], preferred_element_type=jnp.float32
    ).astype(o_ref.dtype)


def embedding_forward(tokens, w_e, *, block_tokens=128):
    """tokens: [batch, seq] int, w_e: [d_vocab, d_model] -> [batch, seq, d_model]."""
    batch, seq = tokens.shape
    d_vocab, d_model = w_e.shape
    n = batch * seq

    # Clamp token ids (JAX gather clamps; torch would raise — never DMA OOB).
    tok_flat = jnp.clip(tokens.reshape(n).astype(jnp.int32), 0, d_vocab - 1)

    # Pad token count up to a multiple of the block size (padded rows gather
    # row 0 and are sliced off afterwards).
    n_blocks = pl.cdiv(n, block_tokens)
    n_pad = n_blocks * block_tokens
    if n_pad != n:
        tok_flat = jnp.pad(tok_flat, (0, n_pad - n))
    tok_col = tok_flat.reshape(n_pad, 1)

    out = pl.pallas_call(
        _embed_kernel,
        out_shape=jax.ShapeDtypeStruct((n_pad, d_model), w_e.dtype),
        grid_spec=pltpu.PrefetchScalarGridSpec(
            num_scalar_prefetch=0,
            grid=(n_blocks,),
            in_specs=[
                # Token-id block for this grid step.
                pl.BlockSpec((block_tokens, 1), lambda i: (i, 0)),
                # Full W_E, constant block index -> loaded into VMEM once.
                pl.BlockSpec((d_vocab, d_model), lambda i: (0, 0)),
            ],
            out_specs=pl.BlockSpec((block_tokens, d_model), lambda i: (i, 0)),
        ),
        compiler_params=pltpu.CompilerParams(
            dimension_semantics=("parallel",)),
    )(tok_col, w_e)

    return out[:n].reshape(batch, seq, d_model)


if __name__ == "__main__":
    # Config (synthetic, deterministic): d_vocab=64, d_model=128, init_range=0.02
    d_vocab, d_model = 64, 128
    init_range = 0.02
    batch, seq = 2, 8

    key = jax.random.PRNGKey(0)
    k_w, k_tok = jax.random.split(key)

    # nn.init.normal_(W_E, std=init_range)
    w_e = init_range * jax.random.normal(k_w, (d_vocab, d_model), dtype=jnp.float32)
    tokens = jax.random.randint(k_tok, (batch, seq), 0, d_vocab, dtype=jnp.int32)

    out = embedding_forward(tokens, w_e)
    out = jax.block_until_ready(out)

    # Reference: plain JAX gather (same semantics as torch W_E[tokens]).
    ref = w_e[tokens]
    assert out.shape == (batch, seq, d_model)
    assert out.dtype == jnp.float32
    assert jnp.allclose(out, ref)

    print("KERNEL_OK")
</pallas_src>

<mosaic_0001>
module attributes {stable_mosaic.version = 11 : i64} {
  func.func @_embed_kernel(%arg0: i32, %arg1: memref<128x1xi32, #tpu.memory_space<vmem>>, %arg2: memref<64x128xf32, #tpu.memory_space<vmem>>, %arg3: memref<128x128xf32, #tpu.memory_space<vmem>>) attributes {dimension_semantics = [#tpu.dimension_semantics<parallel>], iteration_bounds = array<i64: 1>, scalar_prefetch = 0 : i64, scratch_operands = 0 : i64, tpu.core_type = #tpu.core_type<tc>, window_params = [{transform_indices = @transform_0, window_bounds = array<i64: 128, 1>}, {pipeline_mode = #tpu.pipeline_mode<synchronous>, transform_indices = @transform_1, window_bounds = array<i64: 64, 128>}, {transform_indices = @transform_2, window_bounds = array<i64: 128, 128>}]} {
    %c0 = arith.constant 0 : index
    %c0_0 = arith.constant 0 : index
    %0 = vector.load %arg1[%c0, %c0_0] : memref<128x1xi32, #tpu.memory_space<vmem>>, vector<128x1xi32>
    %1 = tpu.iota {dimensions = array<i32: 1>} : vector<128x64xi32>
    %2 = vector.broadcast %0 : vector<128x1xi32> to vector<128x64xi32>
    %3 = arith.cmpi eq, %2, %1 : vector<128x64xi32>
    %4 = arith.extui %3 : vector<128x64xi1> to vector<128x64xi32>
    %5 = arith.sitofp %4 : vector<128x64xi32> to vector<128x64xf32>
    %c0_1 = arith.constant 0 : index
    %c0_2 = arith.constant 0 : index
    %6 = vector.load %arg2[%c0_1, %c0_2] : memref<64x128xf32, #tpu.memory_space<vmem>>, vector<64x128xf32>
    %cst = arith.constant dense<0.000000e+00> : vector<128x128xf32>
    %7 = tpu.matmul %5, %6, %cst {dimension_numbers = #tpu.dot_dimension_numbers<[1], [0], [0], [1], [0, 0, 1, 1], [], []>} : vector<128x64xf32>, vector<64x128xf32>, vector<128x128xf32> -> vector<128x128xf32>
    %c0_3 = arith.constant 0 : index
    %c0_4 = arith.constant 0 : index
    %8 = vector.load %arg3[%c0_3, %c0_4] : memref<128x128xf32, #tpu.memory_space<vmem>>, vector<128x128xf32>
    tpu.vector_store %arg3[%c0_3, %c0_4], %7 {strides = array<i32>} : memref<128x128xf32, #tpu.memory_space<vmem>>, vector<128x128xf32>,
    return
  }
  func.func @transform_0(%arg0: i32) -> (i32, i32) {
    %c0_i32 = arith.constant 0 : i32
    %c0_i32_0 = arith.constant 0 : i32
    return %arg0, %c0_i32 : i32, i32
  }
  func.func @transform_1(%arg0: i32) -> (i32, i32) {
    %c0_i32 = arith.constant 0 : i32
    %c0_i32_0 = arith.constant 0 : i32
    %c0_i32_1 = arith.constant 0 : i32
    return %c0_i32, %c0_i32_0 : i32, i32
  }
  func.func @transform_2(%arg0: i32) -> (i32, i32) {
    %c0_i32 = arith.constant 0 : i32
    %c0_i32_0 = arith.constant 0 : i32
    return %arg0, %c0_i32 : i32, i32
  }
}

</mosaic_0001>

<llo_original>
// kernel: tpu_custom_call.1
$region0: #{tpu_custom_call.1}
  #allocation0 [shape = 'u32[]', space=smem, size = 0x4, offset = 0x4, fixed_abs, tag = 'smem constant byte address 0x4 - core index']
  #allocation1 [shape = 'u32[144,128]{1,0:T(1,128)}', space=vmem, size = 0x12000, scoped, tag = 'internal scratch']
  %s0 = inlined_call_operand.vmem [shape: s32[128,1], index: 0, kind: input, shape index: {}]
  %s1 = inlined_call_operand.vmem [shape: f32[64,128], index: 1, kind: input, shape index: {}]
  %s2 = inlined_call_operand.hbm [shape: f32[128,128], index: 2, kind: output, shape index: {}]
  %s3 = sld [smem:[#allocation0]]
  $region18: #{tpu_custom_call.1} parent=0
    _
  %s5 = ssub.s32 1, %s3
  %s6 = scalar_select 0, %s5, %s3
  $region1: #{tpu_custom_call.1} parent=0
    #allocation2 [shape = 'u8[65536]{0}', space=vmem, size = 0x10000, scoped, tag = 'output window, operand 0, single buffered']
    #allocation3 [shape = 's32[1]{0}', space=sflag, size = 0x4, scoped, tag = 'scoped memory for tpu_custom_call.1']
    %7 = vsyncpa [#allocation3], 0
    // Predicated region
    $region2: #{tpu_custom_call.1} parent=1 // pred_check
      _
    $region3: #{tpu_custom_call.1} parent=1 // pred_check_branch
      %9 = sbr.rel (0) target = $region5
    $region4: #{tpu_custom_call.1} parent=1 // pred_region
      _
    $region5: #{tpu_custom_call.1} parent=1 // pred_fallthru
      _
    // Predicated region
    $region6: #{tpu_custom_call.1} parent=1 // pred_check
      _
    $region7: #{tpu_custom_call.1} parent=1 // pred_check_branch
      %11 = sbr.rel (0) target = $region9
    $region8: #{tpu_custom_call.1} parent=1 // pred_region
      _
    $region9: #{tpu_custom_call.1} parent=1 // pred_fallthru
      _
    %v12 = vld [vmem:[%s0] sm:$0xff]
    %v13 = vld [vmem:[%s0 + $0x8] sm:$0xff]
    %v14 = vld [vmem:[%s0 + $0x10] sm:$0xff]
    %v15 = vld [vmem:[%s0 + $0x18] sm:$0xff]
    %v16 = vld [vmem:[%s0 + $0x20] sm:$0xff]
    %v17 = vld [vmem:[%s0 + $0x28] sm:$0xff]
    %v18 = vld [vmem:[%s0 + $0x30] sm:$0xff]
    %v19 = vld [vmem:[%s0 + $0x38] sm:$0xff]
    %v20 = vld [vmem:[%s0 + $0x40] sm:$0xff]
    %v21 = vld [vmem:[%s0 + $0x48] sm:$0xff]
    %v22 = vld [vmem:[%s0 + $0x50] sm:$0xff]
    %v23 = vld [vmem:[%s0 + $0x58] sm:$0xff]
    %v24 = vld [vmem:[%s0 + $0x60] sm:$0xff]
    %v25 = vld [vmem:[%s0 + $0x68] sm:$0xff]
    %v26 = vld [vmem:[%s0 + $0x70] sm:$0xff]
    %v27 = vld [vmem:[%s0 + $0x78] sm:$0xff]
    %v28 = vlaneseq
    %v29 = vand.u32 %v28, 127
    %30 = vset.pattern.permute.xlu0 0
    %31 = vperm.xlu0 %30, %v12
    %v32 = vpop.permute.xlu0 %31
    %33 = vset.pattern.permute.xlu0 0
    %34 = vperm.xlu0 %33, %v13
    %v35 = vpop.permute.xlu0 %34
    %36 = vset.pattern.permute.xlu0 0
    %37 = vperm.xlu0 %36, %v14
    %v38 = vpop.permute.xlu0 %37
    %39 = vset.pattern.permute.xlu0 0
    %40 = vperm.xlu0 %39, %v15
    %v41 = vpop.permute.xlu0 %40
    %42 = vset.pattern.permute.xlu0 0
    %43 = vperm.xlu0 %42, %v16
    %v44 = vpop.permute.xlu0 %43
    %45 = vset.pattern.permute.xlu0 0
    %46 = vperm.xlu0 %45, %v17
    %v47 = vpop.permute.xlu0 %46
    %48 = vset.pattern.permute.xlu0 0
    %49 = vperm.xlu0 %48, %v18
    %v50 = vpop.permute.xlu0 %49
    %51 = vset.pattern.permute.xlu0 0
    %52 = vperm.xlu0 %51, %v19
    %v53 = vpop.permute.xlu0 %52
    %54 = vset.pattern.permute.xlu0 0
    %55 = vperm.xlu0 %54, %v20
    %v56 = vpop.permute.xlu0 %55
    %57 = vset.pattern.permute.xlu0 0
    %58 = vperm.xlu0 %57, %v21
    %v59 = vpop.permute.xlu0 %58
    %60 = vset.pattern.permute.xlu0 0
    %61 = vperm.xlu0 %60, %v22
    %v62 = vpop.permute.xlu0 %61
    %63 = vset.pattern.permute.xlu0 0
    %64 = vperm.xlu0 %63, %v23
    %v65 = vpop.permute.xlu0 %64
    %66 = vset.pattern.permute.xlu0 0
    %67 = vperm.xlu0 %66, %v24
    %v68 = vpop.permute.xlu0 %67
    %69 = vset.pattern.permute.xlu0 0
    %70 = vperm.xlu0 %69, %v25
    %v71 = vpop.permute.xlu0 %70
    %72 = vset.pattern.permute.xlu0 0
    %73 = vperm.xlu0 %72, %v26
    %v74 = vpop.permute.xlu0 %73
    %75 = vset.pattern.permute.xlu0 0
    %76 = vperm.xlu0 %75, %v27
    %v77 = vpop.permute.xlu0 %76
    %vm78 = vcmp.eq.s32.totalorder %v32, %v29
    %vm79 = vcmp.eq.s32.totalorder %v35, %v29
    %vm80 = vcmp.eq.s32.totalorder %v38, %v29
    %vm81 = vcmp.eq.s32.totalorder %v41, %v29
    %vm82 = vcmp.eq.s32.totalorder %v44, %v29
    %vm83 = vcmp.eq.s32.totalorder %v47, %v29
    %vm84 = vcmp.eq.s32.totalorder %v50, %v29
    %vm85 = vcmp.eq.s32.totalorder %v53, %v29
    %vm86 = vcmp.eq.s32.totalorder %v56, %v29
    %vm87 = vcmp.eq.s32.totalorder %v59, %v29
    %vm88 = vcmp.eq.s32.totalorder %v62, %v29
    %vm89 = vcmp.eq.s32.totalorder %v65, %v29
    %vm90 = vcmp.eq.s32.totalorder %v68, %v29
    %vm91 = vcmp.eq.s32.totalorder %v71, %v29
    %vm92 = vcmp.eq.s32.totalorder %v74, %v29
    %vm93 = vcmp.eq.s32.totalorder %v77, %v29
    %v94 = vsel %vm78, 1, 0
    %v95 = vsel %vm79, 1, 0
    %v96 = vsel %vm80, 1, 0
    %v97 = vsel %vm81, 1, 0
    %v98 = vsel %vm82, 1, 0
    %v99 = vsel %vm83, 1, 0
    %v100 = vsel %vm84, 1, 0
    %v101 = vsel %vm85, 1, 0
    %v102 = vsel %vm86, 1, 0
    %v103 = vsel %vm87, 1, 0
    %v104 = vsel %vm88, 1, 0
    %v105 = vsel %vm89, 1, 0
    %v106 = vsel %vm90, 1, 0
    %v107 = vsel %vm91, 1, 0
    %v108 = vsel %vm92, 1, 0
    %v109 = vsel %vm93, 1, 0
    %v110 = vcvt.s32.f32 %v94
    %v111 = vcvt.s32.f32 %v95
    %v112 = vcvt.s32.f32 %v96
    %v113 = vcvt.s32.f32 %v97
    %v114 = vcvt.s32.f32 %v98
    %v115 = vcvt.s32.f32 %v99
    %v116 = vcvt.s32.f32 %v100
    %v117 = vcvt.s32.f32 %v101
    %v118 = vcvt.s32.f32 %v102
    %v119 = vcvt.s32.f32 %v103
    %v120 = vcvt.s32.f32 %v104
    %v121 = vcvt.s32.f32 %v105
    %v122 = vcvt.s32.f32 %v106
    %v123 = vcvt.s32.f32 %v107
    %v124 = vcvt.s32.f32 %v108
    %v125 = vcvt.s32.f32 %v109
    %v126 = vld [vmem:[%s1] sm:$0xff]
    %v127 = vld [vmem:[%s1 + $0x8] sm:$0xff]
    %v128 = vld [vmem:[%s1 + $0x10] sm:$0xff]
    %v129 = vld [vmem:[%s1 + $0x18] sm:$0xff]
    %v130 = vld [vmem:[%s1 + $0x20] sm:$0xff]
    %v131 = vld [vmem:[%s1 + $0x28] sm:$0xff]
    %v132 = vld [vmem:[%s1 + $0x30] sm:$0xff]
    %v133 = vld [vmem:[%s1 + $0x38] sm:$0xff]
    %vm134 = vcmask 523264
    %v136 = vsel %vm134, %v110, 0
    %v139 = vsel %vm134, %v111, 0
    %v142 = vsel %vm134, %v112, 0
    %v145 = vsel %vm134, %v113, 0
    %v148 = vsel %vm134, %v114, 0
    %v151 = vsel %vm134, %v115, 0
    %v154 = vsel %vm134, %v116, 0
    %v157 = vsel %vm134, %v117, 0
    %v160 = vsel %vm134, %v118, 0
    %v163 = vsel %vm134, %v119, 0
    %v166 = vsel %vm134, %v120, 0
    %v169 = vsel %vm134, %v121, 0
    %v172 = vsel %vm134, %v122, 0
    %v175 = vsel %vm134, %v123, 0
    %v178 = vsel %vm134, %v124, 0
    %v181 = vsel %vm134, %v125, 0
    %183 = vmatprep.subr.mxu0 0.0
    %184 = vmatpush1.msra.mxu0 0.0
    %185 = vmatprep.subr.mxu0 0.0
    %186 = vmatpush1.msra.mxu0 0.0
    %187 = vmatprep.subr.mxu0 0.0
    %188 = vmatpush1.msra.mxu0 0.0
    %189 = vmatprep.subr.mxu0 0.0
    %190 = vmatpush1.msra.mxu0 0.0
    %191 = vmatprep.subr.mxu0 0.0
    %192 = vmatpush1.msra.mxu0 0.0
    %193 = vmatprep.subr.mxu0 0.0
    %194 = vmatpush1.msra.mxu0 0.0
    %195 = vmatprep.subr.mxu0 0.0
    %196 = vmatpush1.msra.mxu0 0.0
    %197 = vmatprep.subr.mxu0 0.0
    %198 = vmatpush1.msra.mxu0 0.0
    %199 = vmatprep.subr.mxu0 0.0
    %200 = vmatpush1.msra.mxu0 %v133
    %201 = vmatprep.subr.mxu0 0.0
    %202 = vmatpush1.msra.mxu0 %v132
    %203 = vmatprep.subr.mxu0 0.0
    %204 = vmatpush1.msra.mxu0 %v131
    %205 = vmatprep.subr.mxu0 0.0
    %206 = vmatpush1.msra.mxu0 %v130
    %207 = vmatprep.subr.mxu0 0.0
    %208 = vmatpush1.msra.mxu0 %v129
    %209 = vmatprep.subr.mxu0 0.0
    %210 = vmatpush1.msra.mxu0 %v128
    %211 = vmatprep.subr.mxu0 0.0
    %212 = vmatpush1.msra.mxu0 %v127
    %213 = vmatprep.subr.mxu0 0.0
    %214 = vmatpush1.msra.mxu0 %v126
    %215 = vmatprep.subr.mxu0 0.0
    %216 = vmatpush2.msra.mxu0 0.0
    %217 = vmatprep.subr.mxu0 0.0
    %218 = vmatpush2.msra.mxu0 0.0
    %219 = vmatprep.subr.mxu0 0.0
    %220 = vmatpush2.msra.mxu0 0.0
    %221 = vmatprep.subr.mxu0 0.0
    %222 = vmatpush2.msra.mxu0 0.0
    %223 = vmatprep.subr.mxu0 0.0
    %224 = vmatpush2.msra.mxu0 0.0
    %225 = vmatprep.subr.mxu0 0.0
    %226 = vmatpush2.msra.mxu0 0.0
    %227 = vmatprep.subr.mxu0 0.0
    %228 = vmatpush2.msra.mxu0 0.0
    %229 = vmatprep.subr.mxu0 0.0
    %230 = vmatpush2.msra.mxu0 0.0
    %231 = vmatprep.subr.mxu0 0.0
    %232 = vmatpush2.msra.mxu0 0.0
    %233 = vmatprep.subr.mxu0 0.0
    %234 = vmatpush2.msra.mxu0 0.0
    %235 = vmatprep.subr.mxu0 0.0
    %236 = vmatpush2.msra.mxu0 0.0
    %237 = vmatprep.subr.mxu0 0.0
    %238 = vmatpush2.msra.mxu0 0.0
    %239 = vmatprep.subr.mxu0 0.0
    %240 = vmatpush2.msra.mxu0 0.0
    %241 = vmatprep.subr.mxu0 0.0
    %242 = vmatpush2.msra.mxu0 0.0
    %243 = vmatprep.subr.mxu0 0.0
    %244 = vmatpush2.msra.mxu0 0.0
    %245 = vmatprep.subr.mxu0 0.0
    %246 = vmatpush2.msra.mxu0 0.0
    %247 = vmatprep.mubr.f32.mxu0 0.0
    %248 = vmatmul.mubr.f32.gmra.mxu0 %v136
    %v249 = vpop.f32.mrf.mxu0
    %v250 = vadd.f32 0.0, %v249
    %v251 = vpop.f32.mrf.mxu0
    %252 = vmatprep.mubr.f32.mxu0 0.0
    %253 = vmatmul.mubr.f32.gmra.mxu0 %v139
    %v254 = vpop.f32.mrf.mxu0
    %v255 = vadd.f32 0.0, %v254
    %v256 = vpop.f32.mrf.mxu0
    %257 = vmatprep.mubr.f32.mxu0 0.0
    %258 = vmatmul.mubr.f32.gmra.mxu0 %v142
    %v259 = vpop.f32.mrf.mxu0
    %v260 = vadd.f32 0.0, %v259
    %v261 = vpop.f32.mrf.mxu0
    %262 = vmatprep.mubr.f32.mxu0 0.0
    %263 = vmatmul.mubr.f32.gmra.mxu0 %v145
    %v264 = vpop.f32.mrf.mxu0
    %v265 = vadd.f32 0.0, %v264
    %v266 = vpop.f32.mrf.mxu0
    %267 = vmatprep.mubr.f32.mxu0 0.0
    %268 = vmatmul.mubr.f32.gmra.mxu0 %v148
    %v269 = vpop.f32.mrf.mxu0
    %v270 = vadd.f32 0.0, %v269
    %v271 = vpop.f32.mrf.mxu0
    %272 = vmatprep.mubr.f32.mxu0 0.0
    %273 = vmatmul.mubr.f32.gmra.mxu0 %v151
    %v274 = vpop.f32.mrf.mxu0
    %v275 = vadd.f32 0.0, %v274
    %v276 = vpop.f32.mrf.mxu0
    %277 = vmatprep.mubr.f32.mxu0 0.0
    %278 = vmatmul.mubr.f32.gmra.mxu0 %v154
    %v279 = vpop.f32.mrf.mxu0
    %v280 = vadd.f32 0.0, %v279
    %v281 = vpop.f32.mrf.mxu0
    %282 = vmatprep.mubr.f32.mxu0 0.0
    %283 = vmatmul.mubr.f32.gmra.mxu0 %v157
    %v284 = vpop.f32.mrf.mxu0
    %v285 = vadd.f32 0.0, %v284
    %v286 = vpop.f32.mrf.mxu0
    %287 = vmatprep.mubr.f32.mxu0 0.0
    %288 = vmatmul.mubr.f32.gmra.mxu0 %v160
    %v289 = vpop.f32.mrf.mxu0
    %v290 = vadd.f32 0.0, %v289
    %v291 = vpop.f32.mrf.mxu0
    %292 = vmatprep.mubr.f32.mxu0 0.0
    %293 = vmatmul.mubr.f32.gmra.mxu0 %v163
    %v294 = vpop.f32.mrf.mxu0
    %v295 = vadd.f32 0.0, %v294
    %v296 = vpop.f32.mrf.mxu0
    %297 = vmatprep.mubr.f32.mxu0 0.0
    %298 = vmatmul.mubr.f32.gmra.mxu0 %v166
    %v299 = vpop.f32.mrf.mxu0
    %v300 = vadd.f32 0.0, %v299
    %v301 = vpop.f32.mrf.mxu0
    %302 = vmatprep.mubr.f32.mxu0 0.0
    %303 = vmatmul.mubr.f32.gmra.mxu0 %v169
    %v304 = vpop.f32.mrf.mxu0
    %v305 = vadd.f32 0.0, %v304
    %v306 = vpop.f32.mrf.mxu0
    %307 = vmatprep.mubr.f32.mxu0 0.0
    %308 = vmatmul.mubr.f32.gmra.mxu0 %v172
    %v309 = vpop.f32.mrf.mxu0
    %v310 = vadd.f32 0.0, %v309
    %v311 = vpop.f32.mrf.mxu0
    %312 = vmatprep.mubr.f32.mxu0 0.0
    %313 = vmatmul.mubr.f32.gmra.mxu0 %v175
    %v314 = vpop.f32.mrf.mxu0
    %v315 = vadd.f32 0.0, %v314
    %v316 = vpop.f32.mrf.mxu0
    %317 = vmatprep.mubr.f32.mxu0 0.0
    %318 = vmatmul.mubr.f32.gmra.mxu0 %v178
    %v319 = vpop.f32.mrf.mxu0
    %v320 = vadd.f32 0.0, %v319
    %v321 = vpop.f32.mrf.mxu0
    %322 = vmatprep.mubr.f32.mxu0 0.0
    %323 = vmatmul.mubr.f32.gmra.mxu0 %v181
    %v324 = vpop.f32.mrf.mxu0
    %v325 = vadd.f32 0.0, %v324
    %v326 = vpop.f32.mrf.mxu0
    %327 = vdwg.mxu0
    %328 = vst [vmem:[#allocation2] sm:$0xff] %v250
    %329 = vst [vmem:[#allocation2 + $0x8] sm:$0xff] %v255
    %330 = vst [vmem:[#allocation2 + $0x10] sm:$0xff] %v260
    %331 = vst [vmem:[#allocation2 + $0x18] sm:$0xff] %v265
    %332 = vst [vmem:[#allocation2 + $0x20] sm:$0xff] %v270
    %333 = vst [vmem:[#allocation2 + $0x28] sm:$0xff] %v275
    %334 = vst [vmem:[#allocation2 + $0x30] sm:$0xff] %v280
    %335 = vst [vmem:[#allocation2 + $0x38] sm:$0xff] %v285
    %336 = vst [vmem:[#allocation2 + $0x40] sm:$0xff] %v290
    %337 = vst [vmem:[#allocation2 + $0x48] sm:$0xff] %v295
    %338 = vst [vmem:[#allocation2 + $0x50] sm:$0xff] %v300
    %339 = vst [vmem:[#allocation2 + $0x58] sm:$0xff] %v305
    %340 = vst [vmem:[#allocation2 + $0x60] sm:$0xff] %v310
    %341 = vst [vmem:[#allocation2 + $0x68] sm:$0xff] %v315
    %342 = vst [vmem:[#allocation2 + $0x70] sm:$0xff] %v320
    %343 = vst [vmem:[#allocation2 + $0x78] sm:$0xff] %v325
    // Predicated region
    $region10: #{tpu_custom_call.1} parent=1 // pred_check
      _
    $region11: #{tpu_custom_call.1} parent=1 // pred_check_branch
      %345 = sbr.rel (0) target = $region13
    $region12: #{tpu_custom_call.1} parent=1 // pred_region
      %s347 = ssub.s32 2048, 2048
      %348 = vsyncadd [#allocation3], %s347
      %s349 = sshll.u32 [#allocation2], 4
      %s350 = int_to_ptr.vmem [resolvable:$true] %s349
      %355 = dma.vmem_to_hbm [thread:$0]  %s350, 2048, %s2, [#allocation3], 128, 128, 8
    $region13: #{tpu_custom_call.1} parent=1 // pred_fallthru
      _
    // Predicated region
    $region14: #{tpu_custom_call.1} parent=1 // pred_check
      _
    $region15: #{tpu_custom_call.1} parent=1 // pred_check_branch
      %357 = sbr.rel (0) target = $region17
    $region16: #{tpu_custom_call.1} parent=1 // pred_region
      %358 = dma.done [#allocation3], 2048
    $region17: #{tpu_custom_call.1} parent=1 // pred_fallthru
      _
    %359 = vsyncpa [#allocation3], 1

</llo_original>
